<compile_context>
chip_gen: v7x
topology: tpu7x:2x2x1
jax: 0.10.0
libtpu: 0.0.40
codegen_flags: <defaults>
</compile_context>

<pallas_src>
import functools
import math

import jax
import jax.numpy as jnp
from jax.experimental import pallas as pl
from jax.experimental.pallas import tpu as pltpu


# -----------------------------------------------------------------------------
# Helpers
# -----------------------------------------------------------------------------
def _round_up(a, b):
    return ((a + b - 1) // b) * b


def _cdiv(a, b):
    return (a + b - 1) // b


def _vmem_capacity_bytes():
    try:
        return int(pltpu.get_tpu_info().vmem_capacity_bytes)
    except Exception:
        return 64 << 20  # conservative fallback (v7x physical VMEM)


def _num_tensorcores(default=2):
    """Best-effort TensorCore-per-chip query; falls back to `default`."""
    try:
        info = pltpu.get_tpu_info()
        for name in ("num_cores", "core_count", "num_tensorcores",
                     "tensorcore_count"):
            v = getattr(info, name, None)
            if v:
                return max(1, min(8, int(v)))
    except Exception:
        pass
    return default


def _per_row_vmem_bytes(n_cols, itemsize, extra_cols=0, extra_itemsize=4):
    """VMEM bytes needed per tile row: double-buffered input tiles (lane padded
    to 128), ~3 tile-sized f32 temporaries, and lane-padded (rows,1) scalars."""
    v_pad = _round_up(max(1, n_cols), 128)
    e_pad = _round_up(extra_cols, 128) if extra_cols else 0
    return (2 * v_pad * itemsize            # double-buffered logits tile
            + 2 * e_pad * extra_itemsize    # double-buffered gate tile (fused)
            + 3 * v_pad * 4                 # f32 temps: exp(x-m), iota/select, w*x
            + 2 * 128 * 4                   # double-buffered target tile (padded)
            + 12 * 128 * 4)                 # (rows,1) row scalars / accumulators


def _pick_tile_rows(n_rows, n_cols, *, vmem, itemsize=4, extra_cols=0,
                    extra_itemsize=4, max_rows=16384):
    per_row = _per_row_vmem_bytes(n_cols, itemsize, extra_cols, extra_itemsize)
    budget = (vmem * 2) // 5                 # ~40% of physical VMEM
    align = 16 if itemsize < 4 else 8
    rows = budget // per_row
    rows = max(align, min(max_rows, rows))
    rows = (rows // align) * align
    rows = min(rows, _round_up(n_rows, align))
    return max(align, int(rows))


# -----------------------------------------------------------------------------
# In-kernel row math (shared by fused / unfused kernels)
# -----------------------------------------------------------------------------
def _kl_rows(x_ref, tgt_ref, blk, *, base, conf, const_c, padding_idx,
             n_rows, tile_rows):
    """Per-row KL(true_dist || softmax(x)) for one tile, masked for padding
    tokens and out-of-range rows.  Returns (masked per-row KL, valid int32,
    in-bounds mask)."""
    x = x_ref[...].astype(jnp.float32)            # (TM, V)
    tgt = tgt_ref[...]                            # (TM, 1) int32
    TM = x.shape[0]

    row_ids = blk * tile_rows + jax.lax.broadcasted_iota(jnp.int32, (TM, 1), 0)
    in_bounds = row_ids < n_rows
    valid = in_bounds & (tgt != padding_idx)      # (TM, 1) bool

    # logsumexp (row scalars only).
    m = jnp.max(x, axis=1, keepdims=True)
    lse = m + jnp.log(jnp.sum(jnp.exp(x - m), axis=1, keepdims=True))

    # Single weighted reduce:  sum_v (base + (conf-base)*[v==tgt]) * x_v
    tgt_safe = jnp.where(valid, tgt, 0)
    col = jax.lax.broadcasted_iota(jnp.int32, x.shape, 1)
    wsum = jnp.sum(jnp.where(col == tgt_safe, conf, base) * x,
                   axis=1, keepdims=True)

    # KL row-sum (lse coefficient is exactly 1):  C + lse - sum_v w_v x_v
    per_row = const_c + lse - wsum
    return jnp.where(valid, per_row, 0.0), valid.astype(jnp.int32), in_bounds


def _entropy_rows(g_ref, in_bounds):
    """Per-row softmax entropy: m + log(s) - sum(e*g)/s (eps dropped)."""
    g = g_ref[...].astype(jnp.float32)            # (TM, E)
    mg = jnp.max(g, axis=1, keepdims=True)
    eg = jnp.exp(g - mg)
    sg = jnp.sum(eg, axis=1, keepdims=True)
    dg = jnp.sum(eg * g, axis=1, keepdims=True)
    ent = mg + jnp.log(sg) - dg / sg
    return jnp.where(in_bounds, ent, 0.0)


# -----------------------------------------------------------------------------
# Kernel 1 (fused): label-smoothing KL + non-pad count + router entropy
# -----------------------------------------------------------------------------
def _fused_loss_kernel(x_ref, tgt_ref, g_ref, sum_ref, cnt_ref, ent_ref,
                       acc_sum, acc_cnt, acc_ent, *,
                       base, conf, const_c, padding_idx,
                       n_rows, tile_rows, tiles_per_core):
    c = pl.program_id(0)          # core-split axis ("parallel")
    t = pl.program_id(1)          # reduction over row tiles ("arbitrary")
    n_t = pl.num_programs(1)

    @pl.when(t == 0)
    def _():
        acc_sum[...] = jnp.zeros_like(acc_sum)
        acc_cnt[...] = jnp.zeros_like(acc_cnt)
        acc_ent[...] = jnp.zeros_like(acc_ent)

    per_row, valid_i32, in_bounds = _kl_rows(
        x_ref, tgt_ref, c * tiles_per_core + t,
        base=base, conf=conf, const_c=const_c, padding_idx=padding_idx,
        n_rows=n_rows, tile_rows=tile_rows)
    acc_sum[...] += per_row
    acc_cnt[...] += valid_i32
    # Router entropy sums over ALL in-bounds tokens (padding_idx included),
    # matching the torch module.
    acc_ent[...] += _entropy_rows(g_ref, in_bounds)

    @pl.when(t == n_t - 1)
    def _():
        sum_ref[...] = jnp.sum(acc_sum[...]).reshape(1, 1, 1)
        cnt_ref[...] = jnp.sum(acc_cnt[...]).reshape(1, 1, 1)
        ent_ref[...] = jnp.sum(acc_ent[...]).reshape(1, 1, 1)


# -----------------------------------------------------------------------------
# Kernel 1b (unfused): label-smoothing KL + non-pad count only
# -----------------------------------------------------------------------------
def _label_smoothing_kernel(x_ref, tgt_ref, sum_ref, cnt_ref,
                            acc_sum, acc_cnt, *,
                            base, conf, const_c, padding_idx,
                            n_rows, tile_rows, tiles_per_core):
    c = pl.program_id(0)
    t = pl.program_id(1)
    n_t = pl.num_programs(1)

    @pl.when(t == 0)
    def _():
        acc_sum[...] = jnp.zeros_like(acc_sum)
        acc_cnt[...] = jnp.zeros_like(acc_cnt)

    per_row, valid_i32, _ = _kl_rows(
        x_ref, tgt_ref, c * tiles_per_core + t,
        base=base, conf=conf, const_c=const_c, padding_idx=padding_idx,
        n_rows=n_rows, tile_rows=tile_rows)
    acc_sum[...] += per_row
    acc_cnt[...] += valid_i32

    @pl.when(t == n_t - 1)
    def _():
        sum_ref[...] = jnp.sum(acc_sum[...]).reshape(1, 1, 1)
        cnt_ref[...] = jnp.sum(acc_cnt[...]).reshape(1, 1, 1)


# -----------------------------------------------------------------------------
# Kernel 2 (fallback when gate token count != N): router entropy only
# -----------------------------------------------------------------------------
def _dynamic_loss_kernel(g_ref, out_ref, acc_ref, *, n_rows, tile_rows):
    i = pl.program_id(0)

    @pl.when(i == 0)
    def _():
        acc_ref[...] = jnp.zeros_like(acc_ref)

    TM = acc_ref.shape[0]
    row_ids = i * tile_rows + jax.lax.broadcasted_iota(jnp.int32, (TM, 1), 0)
    acc_ref[...] += _entropy_rows(g_ref, row_ids < n_rows)

    @pl.when(i == pl.num_programs(0) - 1)
    def _():
        out_ref[...] = jnp.sum(acc_ref[...]).reshape(1, 1)


# -----------------------------------------------------------------------------
# Python wrapper
# -----------------------------------------------------------------------------
def label_smoothing_moe_dynamic_loss(x, gate_logits, target, *,
                                     size, padding_idx, smoothing,
                                     normalize_length=False,
                                     dynamic_loss_coef=1e-4,
                                     eps=1e-8,
                                     tile_rows=None,
                                     dyn_tile_rows=None,
                                     num_cores=None):
    """Replicates LabelSmoothingLossMoE_Dynamic.forward.

    x:            (batch, seqlen, size) float (f32 or bf16) logits
    gate_logits:  (..., num_experts) router logits (third element of router_out)
    target:       (batch, seqlen) int targets, padding marked with padding_idx
    """
    assert x.shape[-1] == size
    B, S, V = x.shape
    N = B * S

    confidence = 1.0 - smoothing
    base = smoothing / (V - 1)
    # 0*log(0) := 0, matching torch.nn.KLDivLoss's handling of zero targets.
    const_c = 0.0
    if confidence > 0.0:
        const_c += confidence * math.log(confidence)
    if base > 0.0:
        const_c += (V - 1) * base * math.log(base)

    x2 = x.reshape(N, V)                               # keep dtype (bf16 ok)
    t2 = target.reshape(N, 1).astype(jnp.int32)

    E = gate_logits.shape[-1]
    g2 = gate_logits.reshape(-1, E)
    n_tok = g2.shape[0]
    fuse_gate = (n_tok == N)

    itemsize = jnp.dtype(x2.dtype).itemsize
    g_itemsize = jnp.dtype(g2.dtype).itemsize
    vmem_bytes = _vmem_capacity_bytes()
    align = 16 if itemsize < 4 else 8

    if tile_rows is None:
        tile_rows = _pick_tile_rows(
            N, V, vmem=vmem_bytes, itemsize=itemsize,
            extra_cols=E if fuse_gate else 0, extra_itemsize=g_itemsize)
    tile_rows = max(align, (int(tile_rows) // align) * align)

    num_tiles = _cdiv(N, tile_rows)
    if num_cores is None:
        num_cores = _num_tensorcores(default=2)
    nc = max(1, min(int(num_cores), num_tiles))
    t_per_core = _cdiv(num_tiles, nc)

    per_row_bytes = _per_row_vmem_bytes(
        V, itemsize, E if fuse_gate else 0, g_itemsize)
    needed = tile_rows * per_row_bytes + (4 << 20)
    vmem_limit = int(min(vmem_bytes * 7 // 8, max(needed, 32 << 20)))

    def row_block(c, t):
        # Clamp so every DMA stays in bounds; the kernel masks rows >= N, so
        # clamped (duplicated) overflow tiles contribute exactly zero.
        return (jnp.minimum(c * t_per_core + t, num_tiles - 1), 0)

    common = dict(base=float(base), conf=float(confidence),
                  const_c=float(const_c), padding_idx=int(padding_idx),
                  n_rows=int(N), tile_rows=int(tile_rows),
                  tiles_per_core=int(t_per_core))

    if fuse_gate:
        kern = functools.partial(_fused_loss_kernel, **common)
        part_sum, part_cnt, part_ent = pl.pallas_call(
            kern,
            out_shape=(jax.ShapeDtypeStruct((nc, 1, 1), jnp.float32),
                       jax.ShapeDtypeStruct((nc, 1, 1), jnp.int32),
                       jax.ShapeDtypeStruct((nc, 1, 1), jnp.float32)),
            grid_spec=pltpu.PrefetchScalarGridSpec(
                num_scalar_prefetch=0,
                grid=(nc, t_per_core),
                in_specs=[
                    pl.BlockSpec((tile_rows, V), row_block),
                    pl.BlockSpec((tile_rows, 1), row_block),
                    pl.BlockSpec((tile_rows, E), row_block),
                ],
                out_specs=[
                    pl.BlockSpec((1, 1, 1), lambda c, t: (c, 0, 0)),
                    pl.BlockSpec((1, 1, 1), lambda c, t: (c, 0, 0)),
                    pl.BlockSpec((1, 1, 1), lambda c, t: (c, 0, 0)),
                ],
                scratch_shapes=[
                    pltpu.VMEM((tile_rows, 1), jnp.float32),
                    pltpu.VMEM((tile_rows, 1), jnp.int32),
                    pltpu.VMEM((tile_rows, 1), jnp.float32),
                ]),
            compiler_params=pltpu.CompilerParams(
                dimension_semantics=("parallel", "arbitrary"),
                vmem_limit_bytes=vmem_limit),
        )(x2, t2, g2)
        dyn = jnp.sum(part_ent)
    else:
        ls_kernel = functools.partial(_label_smoothing_kernel, **common)
        part_sum, part_cnt = pl.pallas_call(
            ls_kernel,
            out_shape=(jax.ShapeDtypeStruct((nc, 1, 1), jnp.float32),
                       jax.ShapeDtypeStruct((nc, 1, 1), jnp.int32)),
            grid_spec=pltpu.PrefetchScalarGridSpec(
                num_scalar_prefetch=0,
                grid=(nc, t_per_core),
                in_specs=[
                    pl.BlockSpec((tile_rows, V), row_block),
                    pl.BlockSpec((tile_rows, 1), row_block),
                ],
                out_specs=[
                    pl.BlockSpec((1, 1, 1), lambda c, t: (c, 0, 0)),
                    pl.BlockSpec((1, 1, 1), lambda c, t: (c, 0, 0)),
                ],
                scratch_shapes=[
                    pltpu.VMEM((tile_rows, 1), jnp.float32),
                    pltpu.VMEM((tile_rows, 1), jnp.int32),
                ]),
            compiler_params=pltpu.CompilerParams(
                dimension_semantics=("parallel", "arbitrary"),
                vmem_limit_bytes=vmem_limit),
        )(x2, t2)

        if dyn_tile_rows is None:
            dyn_tile_rows = min(4096, _round_up(n_tok, 8))
        dyn_tile_rows = max(8, (int(dyn_tile_rows) // 8) * 8)
        dyn_kernel = functools.partial(_dynamic_loss_kernel,
                                       n_rows=int(n_tok),
                                       tile_rows=int(dyn_tile_rows))
        dyn = pl.pallas_call(
            dyn_kernel,
            out_shape=jax.ShapeDtypeStruct((1, 1), jnp.float32),
            grid_spec=pltpu.PrefetchScalarGridSpec(
                num_scalar_prefetch=0,
                grid=(_cdiv(n_tok, dyn_tile_rows),),
                in_specs=[pl.BlockSpec((dyn_tile_rows, E), lambda i: (i, 0))],
                out_specs=pl.BlockSpec((1, 1), lambda i: (0, 0)),
                scratch_shapes=[pltpu.VMEM((dyn_tile_rows, 1), jnp.float32)]),
            compiler_params=pltpu.CompilerParams(
                dimension_semantics=("arbitrary",)),
        )(g2)[0, 0]

    ls_sum = jnp.sum(part_sum)                      # total KL over non-pad tokens
    nonpad = jnp.sum(part_cnt).astype(jnp.float32)  # exact int32 count -> f32

    denom = nonpad if normalize_length else jnp.float32(B)
    label_smoothing_loss = ls_sum / denom
    return label_smoothing_loss + jnp.float32(dynamic_loss_coef) * dyn


# -----------------------------------------------------------------------------
# Pure-JAX reference (for correctness checks)
# -----------------------------------------------------------------------------
def _reference(x, gate_logits, target, *, size, padding_idx, smoothing,
               normalize_length=False, dynamic_loss_coef=1e-4, eps=1e-8):
    B, S, V = x.shape
    x2 = x.reshape(-1, V).astype(jnp.float32)
    t = target.reshape(-1)
    ignore = t == padding_idx
    t_safe = jnp.where(ignore, 0, t)
    base = smoothing / (V - 1)
    true_dist = jnp.full_like(x2, base)
    true_dist = true_dist.at[jnp.arange(x2.shape[0]), t_safe].set(1.0 - smoothing)
    logp = jax.nn.log_softmax(x2, axis=1)
    kl = true_dist * (jnp.log(true_dist) - logp)
    kl = jnp.where(ignore[:, None], 0.0, kl)
    denom = (x2.shape[0] - jnp.sum(ignore)) if normalize_length else B
    ls = jnp.sum(kl) / denom
    p = jax.nn.softmax(gate_logits.astype(jnp.float32), axis=-1)
    dyn = -jnp.sum(p * jnp.log(p + eps))
    return ls + dynamic_loss_coef * dyn


if __name__ == "__main__":
    # Module hyper-parameters (deterministic, in-script).
    size = 32              # number of classes
    padding_idx = -1
    smoothing = 0.1
    dynamic_loss_coef = 1e-4
    num_experts = 8

    key = jax.random.PRNGKey(0)

    def make_inputs(batch, seqlen, k, gate_tokens=None):
        kx, kt, kg = jax.random.split(k, 3)
        x = jax.random.normal(kx, (batch, seqlen, size), dtype=jnp.float32)
        tgt = jax.random.randint(kt, (batch, seqlen), 0, size, dtype=jnp.int32)
        tgt = tgt.at[0, -1].set(padding_idx)      # a few padding positions
        tgt = tgt.at[1, 0].set(padding_idx)
        g_shape = ((batch, seqlen, num_experts) if gate_tokens is None
                   else (gate_tokens, num_experts))
        g = jax.random.normal(kg, g_shape, dtype=jnp.float32)
        # router_out in the torch module is a 3-tuple; only gate_logits is used.
        return x, tgt, g

    # Config A: auto tile sizing, gate fused (n_tok == N), normalize_length=False.
    xA, tA, gA = make_inputs(2, 8, jax.random.fold_in(key, 0))
    router_out_A = (None, None, gA)
    lossA = label_smoothing_moe_dynamic_loss(
        xA, router_out_A[2], tA,
        size=size, padding_idx=padding_idx, smoothing=smoothing,
        normalize_length=False, dynamic_loss_coef=dynamic_loss_coef)
    refA = _reference(xA, gA, tA, size=size, padding_idx=padding_idx,
                      smoothing=smoothing, normalize_length=False,
                      dynamic_loss_coef=dynamic_loss_coef)

    # Config B: explicit small tile with a ragged last tile (N=24, tile=16),
    # gate fused, normalize_length=True (exercises the in-kernel non-pad count).
    xB, tB, gB = make_inputs(2, 12, jax.random.fold_in(key, 1))
    router_out_B = (None, None, gB)
    lossB = label_smoothing_moe_dynamic_loss(
        xB, router_out_B[2], tB,
        size=size, padding_idx=padding_idx, smoothing=smoothing,
        normalize_length=True, dynamic_loss_coef=dynamic_loss_coef,
        tile_rows=16)
    refB = _reference(xB, gB, tB, size=size, padding_idx=padding_idx,
                      smoothing=smoothing, normalize_length=True,
                      dynamic_loss_coef=dynamic_loss_coef)

    # Config C: gate token count != N -> unfused fallback path.
    xC, tC, gC = make_inputs(2, 8, jax.random.fold_in(key, 2), gate_tokens=40)
    router_out_C = (None, None, gC)
    lossC = label_smoothing_moe_dynamic_loss(
        xC, router_out_C[2], tC,
        size=size, padding_idx=padding_idx, smoothing=smoothing,
        normalize_length=False, dynamic_loss_coef=dynamic_loss_coef)
    refC = _reference(xC, gC, tC, size=size, padding_idx=padding_idx,
                      smoothing=smoothing, normalize_length=False,
                      dynamic_loss_coef=dynamic_loss_coef)

    lossA, lossB, lossC = jax.block_until_ready((lossA, lossB, lossC))
    assert jnp.allclose(lossA, refA, rtol=1e-5, atol=1e-5), (lossA, refA)
    assert jnp.allclose(lossB, refB, rtol=1e-5, atol=1e-5), (lossB, refB)
    assert jnp.allclose(lossC, refC, rtol=1e-5, atol=1e-5), (lossC, refC)

    print("KERNEL_OK")
</pallas_src>

<mosaic_0001>
module attributes {stable_mosaic.version = 11 : i64} {
  func.func @_fused_loss_kernel(%arg0: i32, %arg1: i32, %arg2: memref<16x32xf32, #tpu.memory_space<vmem>>, %arg3: memref<16x1xi32, #tpu.memory_space<vmem>>, %arg4: memref<16x8xf32, #tpu.memory_space<vmem>>, %arg5: memref<1x1x1xf32, #tpu.memory_space<vmem>>, %arg6: memref<1x1x1xi32, #tpu.memory_space<vmem>>, %arg7: memref<1x1x1xf32, #tpu.memory_space<vmem>>, %arg8: memref<16x1xf32, #tpu.memory_space<vmem>>, %arg9: memref<16x1xi32, #tpu.memory_space<vmem>>, %arg10: memref<16x1xf32, #tpu.memory_space<vmem>>) attributes {dimension_semantics = [#tpu.dimension_semantics<parallel>, #tpu.dimension_semantics<arbitrary>], iteration_bounds = array<i64: 1, 1>, scalar_prefetch = 0 : i64, scratch_operands = 3 : i64, tpu.core_type = #tpu.core_type<tc>, window_params = [{transform_indices = @transform_0, window_bounds = array<i64: 16, 32>}, {transform_indices = @transform_1, window_bounds = array<i64: 16, 1>}, {transform_indices = @transform_2, window_bounds = array<i64: 16, 8>}, {transform_indices = @transform_3, window_bounds = array<i64: 1, 1, 1>}, {transform_indices = @transform_4, window_bounds = array<i64: 1, 1, 1>}, {transform_indices = @transform_5, window_bounds = array<i64: 1, 1, 1>}]} {
    %c0_i32 = arith.constant 0 : i32
    %0 = arith.cmpi eq, %arg1, %c0_i32 : i32
    %1 = arith.extui %0 : i1 to i32
    %c0_i32_0 = arith.constant 0 : i32
    %2 = arith.cmpi ne, %1, %c0_i32_0 : i32
    scf.if %2 {
      %cst_32 = arith.constant 0.000000e+00 : f32
      %71 = vector.broadcast %cst_32 : f32 to vector<16x1xf32>
      %c0_33 = arith.constant 0 : index
      %c0_34 = arith.constant 0 : index
      %72 = vector.load %arg8[%c0_33, %c0_34] : memref<16x1xf32, #tpu.memory_space<vmem>>, vector<16x1xf32>
      tpu.vector_store %arg8[%c0_33, %c0_34], %71 {strides = array<i32>} : memref<16x1xf32, #tpu.memory_space<vmem>>, vector<16x1xf32>,
      %c0_i32_35 = arith.constant 0 : i32
      %73 = vector.broadcast %c0_i32_35 : i32 to vector<16x1xi32>
      %c0_36 = arith.constant 0 : index
      %c0_37 = arith.constant 0 : index
      %74 = vector.load %arg9[%c0_36, %c0_37] : memref<16x1xi32, #tpu.memory_space<vmem>>, vector<16x1xi32>
      tpu.vector_store %arg9[%c0_36, %c0_37], %73 {strides = array<i32>} : memref<16x1xi32, #tpu.memory_space<vmem>>, vector<16x1xi32>,
      %cst_38 = arith.constant 0.000000e+00 : f32
      %75 = vector.broadcast %cst_38 : f32 to vector<16x1xf32>
      %c0_39 = arith.constant 0 : index
      %c0_40 = arith.constant 0 : index
      %76 = vector.load %arg10[%c0_39, %c0_40] : memref<16x1xf32, #tpu.memory_space<vmem>>, vector<16x1xf32>
      tpu.vector_store %arg10[%c0_39, %c0_40], %75 {strides = array<i32>} : memref<16x1xf32, #tpu.memory_space<vmem>>, vector<16x1xf32>,
    } else {
    }
    %c1_i32 = arith.constant 1 : i32
    %3 = arith.muli %arg0, %c1_i32 : i32
    %4 = arith.addi %3, %arg1 : i32
    %c0 = arith.constant 0 : index
    %c0_1 = arith.constant 0 : index
    %5 = vector.load %arg2[%c0, %c0_1] : memref<16x32xf32, #tpu.memory_space<vmem>>, vector<16x32xf32>
    %c0_2 = arith.constant 0 : index
    %c0_3 = arith.constant 0 : index
    %6 = vector.load %arg3[%c0_2, %c0_3] : memref<16x1xi32, #tpu.memory_space<vmem>>, vector<16x1xi32>
    %c16_i32 = arith.constant 16 : i32
    %7 = arith.muli %4, %c16_i32 : i32
    %8 = tpu.iota {dimensions = array<i32: 0>} : vector<16x1xi32>
    %9 = vector.broadcast %7 : i32 to vector<16x1xi32>
    %10 = arith.addi %9, %8 : vector<16x1xi32>
    %c16_i32_4 = arith.constant 16 : i32
    %11 = vector.broadcast %c16_i32_4 : i32 to vector<16x1xi32>
    %12 = arith.cmpi slt, %10, %11 : vector<16x1xi32>
    %c-1_i32 = arith.constant -1 : i32
    %13 = vector.broadcast %c-1_i32 : i32 to vector<16x1xi32>
    %14 = arith.cmpi ne, %6, %13 : vector<16x1xi32>
    %15 = arith.andi %12, %14 : vector<16x1xi1>
    %cst = arith.constant dense<0xFF800000> : vector<16xf32>
    %16 = vector.multi_reduction <maximumf>, %5, %cst [1] : vector<16x32xf32> to vector<16xf32>
    %17 = vector.shape_cast %16 : vector<16xf32> to vector<16x1xf32>
    %18 = vector.broadcast %17 : vector<16x1xf32> to vector<16x32xf32>
    %19 = arith.subf %5, %18 : vector<16x32xf32>
    %20 = math.exp %19 : vector<16x32xf32>
    %cst_5 = arith.constant dense<0.000000e+00> : vector<16xf32>
    %21 = vector.multi_reduction <add>, %20, %cst_5 [1] : vector<16x32xf32> to vector<16xf32>
    %22 = vector.shape_cast %21 : vector<16xf32> to vector<16x1xf32>
    %23 = math.log %22 : vector<16x1xf32>
    %24 = arith.addf %17, %23 : vector<16x1xf32>
    %c0_i32_6 = arith.constant 0 : i32
    %25 = vector.broadcast %c0_i32_6 : i32 to vector<16x1xi32>
    %26 = arith.select %15, %6, %25 : vector<16x1xi1>, vector<16x1xi32>
    %27 = tpu.iota {dimensions = array<i32: 1>} : vector<16x32xi32>
    %28 = vector.broadcast %26 : vector<16x1xi32> to vector<16x32xi32>
    %29 = arith.cmpi eq, %27, %28 : vector<16x32xi32>
    %cst_7 = arith.constant 0.899999976 : f32
    %cst_8 = arith.constant 0.0032258064 : f32
    %30 = vector.broadcast %cst_7 : f32 to vector<16x32xf32>
    %31 = vector.broadcast %cst_8 : f32 to vector<16x32xf32>
    %32 = arith.select %29, %30, %31 : vector<16x32xi1>, vector<16x32xf32>
    %33 = arith.mulf %32, %5 : vector<16x32xf32>
    %cst_9 = arith.constant dense<0.000000e+00> : vector<16xf32>
    %34 = vector.multi_reduction <add>, %33, %cst_9 [1] : vector<16x32xf32> to vector<16xf32>
    %35 = vector.shape_cast %34 : vector<16xf32> to vector<16x1xf32>
    %cst_10 = arith.constant -0.668481708 : f32
    %36 = vector.broadcast %cst_10 : f32 to vector<16x1xf32>
    %37 = arith.addf %36, %24 : vector<16x1xf32>
    %38 = arith.subf %37, %35 : vector<16x1xf32>
    %cst_11 = arith.constant 0.000000e+00 : f32
    %39 = vector.broadcast %cst_11 : f32 to vector<16x1xf32>
    %40 = arith.select %15, %38, %39 : vector<16x1xi1>, vector<16x1xf32>
    %41 = arith.extui %15 : vector<16x1xi1> to vector<16x1xi32>
    %c0_12 = arith.constant 0 : index
    %c0_13 = arith.constant 0 : index
    %42 = vector.load %arg8[%c0_12, %c0_13] : memref<16x1xf32, #tpu.memory_space<vmem>>, vector<16x1xf32>
    %43 = arith.addf %42, %40 : vector<16x1xf32>
    %c0_14 = arith.constant 0 : index
    %c0_15 = arith.constant 0 : index
    %44 = vector.load %arg8[%c0_14, %c0_15] : memref<16x1xf32, #tpu.memory_space<vmem>>, vector<16x1xf32>
    tpu.vector_store %arg8[%c0_14, %c0_15], %43 {strides = array<i32>} : memref<16x1xf32, #tpu.memory_space<vmem>>, vector<16x1xf32>,
    %c0_16 = arith.constant 0 : index
    %c0_17 = arith.constant 0 : index
    %45 = vector.load %arg9[%c0_16, %c0_17] : memref<16x1xi32, #tpu.memory_space<vmem>>, vector<16x1xi32>
    %46 = arith.addi %45, %41 : vector<16x1xi32>
    %c0_18 = arith.constant 0 : index
    %c0_19 = arith.constant 0 : index
    %47 = vector.load %arg9[%c0_18, %c0_19] : memref<16x1xi32, #tpu.memory_space<vmem>>, vector<16x1xi32>
    tpu.vector_store %arg9[%c0_18, %c0_19], %46 {strides = array<i32>} : memref<16x1xi32, #tpu.memory_space<vmem>>, vector<16x1xi32>,
    %c0_20 = arith.constant 0 : index
    %c0_21 = arith.constant 0 : index
    %48 = vector.load %arg10[%c0_20, %c0_21] : memref<16x1xf32, #tpu.memory_space<vmem>>, vector<16x1xf32>
    %c0_22 = arith.constant 0 : index
    %c0_23 = arith.constant 0 : index
    %49 = vector.load %arg4[%c0_22, %c0_23] : memref<16x8xf32, #tpu.memory_space<vmem>>, vector<16x8xf32>
    %cst_24 = arith.constant dense<0xFF800000> : vector<16xf32>
    %50 = vector.multi_reduction <maximumf>, %49, %cst_24 [1] : vector<16x8xf32> to vector<16xf32>
    %51 = vector.shape_cast %50 : vector<16xf32> to vector<16x1xf32>
    %52 = vector.broadcast %51 : vector<16x1xf32> to vector<16x8xf32>
    %53 = arith.subf %49, %52 : vector<16x8xf32>
    %54 = math.exp %53 : vector<16x8xf32>
    %cst_25 = arith.constant dense<0.000000e+00> : vector<16xf32>
    %55 = vector.multi_reduction <add>, %54, %cst_25 [1] : vector<16x8xf32> to vector<16xf32>
    %56 = vector.shape_cast %55 : vector<16xf32> to vector<16x1xf32>
    %57 = arith.mulf %54, %49 : vector<16x8xf32>
    %cst_26 = arith.constant dense<0.000000e+00> : vector<16xf32>
    %58 = vector.multi_reduction <add>, %57, %cst_26 [1] : vector<16x8xf32> to vector<16xf32>
    %59 = vector.shape_cast %58 : vector<16xf32> to vector<16x1xf32>
    %60 = math.log %56 : vector<16x1xf32>
    %61 = arith.addf %51, %60 : vector<16x1xf32>
    %62 = arith.divf %59, %56 : vector<16x1xf32>
    %63 = arith.subf %61, %62 : vector<16x1xf32>
    %cst_27 = arith.constant 0.000000e+00 : f32
    %64 = vector.broadcast %cst_27 : f32 to vector<16x1xf32>
    %65 = arith.select %12, %63, %64 : vector<16x1xi1>, vector<16x1xf32>
    %66 = arith.addf %48, %65 : vector<16x1xf32>
    %c0_28 = arith.constant 0 : index
    %c0_29 = arith.constant 0 : index
    %67 = vector.load %arg10[%c0_28, %c0_29] : memref<16x1xf32, #tpu.memory_space<vmem>>, vector<16x1xf32>
    tpu.vector_store %arg10[%c0_28, %c0_29], %66 {strides = array<i32>} : memref<16x1xf32, #tpu.memory_space<vmem>>, vector<16x1xf32>,
    %c0_i32_30 = arith.constant 0 : i32
    %68 = arith.cmpi eq, %arg1, %c0_i32_30 : i32
    %69 = arith.extui %68 : i1 to i32
    %c0_i32_31 = arith.constant 0 : i32
    %70 = arith.cmpi ne, %69, %c0_i32_31 : i32
    scf.if %70 {
      %c0_32 = arith.constant 0 : index
      %c0_33 = arith.constant 0 : index
      %71 = vector.load %arg8[%c0_32, %c0_33] : memref<16x1xf32, #tpu.memory_space<vmem>>, vector<16x1xf32>
      %72 = vector.shape_cast %71 : vector<16x1xf32> to vector<1x16x1xf32>
      %cst_34 = arith.constant dense<0.000000e+00> : vector<1xf32>
      %73 = vector.multi_reduction <add>, %72, %cst_34 [1, 2] : vector<1x16x1xf32> to vector<1xf32>
      %74 = vector.shape_cast %73 : vector<1xf32> to vector<1x1x1xf32>
      %75 = vector.extract %74[0, 0, 0] : f32 from vector<1x1x1xf32>
      %76 = vector.broadcast %75 : f32 to vector<1x1x1xf32>
      %c0_35 = arith.constant 0 : index
      %c0_36 = arith.constant 0 : index
      %c0_37 = arith.constant 0 : index
      %77 = vector.load %arg5[%c0_35, %c0_36, %c0_37] : memref<1x1x1xf32, #tpu.memory_space<vmem>>, vector<1x1x1xf32>
      tpu.vector_store %arg5[%c0_35, %c0_36, %c0_37], %76 {strides = array<i32>} : memref<1x1x1xf32, #tpu.memory_space<vmem>>, vector<1x1x1xf32>,
      %c0_38 = arith.constant 0 : index
      %c0_39 = arith.constant 0 : index
      %78 = vector.load %arg9[%c0_38, %c0_39] : memref<16x1xi32, #tpu.memory_space<vmem>>, vector<16x1xi32>
      %79 = vector.shape_cast %78 : vector<16x1xi32> to vector<1x16x1xi32>
      %cst_40 = arith.constant dense<0> : vector<1xi32>
      %80 = vector.multi_reduction <add>, %79, %cst_40 [1, 2] : vector<1x16x1xi32> to vector<1xi32>
      %81 = vector.shape_cast %80 : vector<1xi32> to vector<1x1x1xi32>
      %82 = vector.extract %81[0, 0, 0] : i32 from vector<1x1x1xi32>
      %83 = vector.broadcast %82 : i32 to vector<1x1x1xi32>
      %c0_41 = arith.constant 0 : index
      %c0_42 = arith.constant 0 : index
      %c0_43 = arith.constant 0 : index
      %84 = vector.load %arg6[%c0_41, %c0_42, %c0_43] : memref<1x1x1xi32, #tpu.memory_space<vmem>>, vector<1x1x1xi32>
      tpu.vector_store %arg6[%c0_41, %c0_42, %c0_43], %83 {strides = array<i32>} : memref<1x1x1xi32, #tpu.memory_space<vmem>>, vector<1x1x1xi32>,
      %c0_44 = arith.constant 0 : index
      %c0_45 = arith.constant 0 : index
      %85 = vector.load %arg10[%c0_44, %c0_45] : memref<16x1xf32, #tpu.memory_space<vmem>>, vector<16x1xf32>
      %86 = vector.shape_cast %85 : vector<16x1xf32> to vector<1x16x1xf32>
      %cst_46 = arith.constant dense<0.000000e+00> : vector<1xf32>
      %87 = vector.multi_reduction <add>, %86, %cst_46 [1, 2] : vector<1x16x1xf32> to vector<1xf32>
      %88 = vector.shape_cast %87 : vector<1xf32> to vector<1x1x1xf32>
      %89 = vector.extract %88[0, 0, 0] : f32 from vector<1x1x1xf32>
      %90 = vector.broadcast %89 : f32 to vector<1x1x1xf32>
      %c0_47 = arith.constant 0 : index
      %c0_48 = arith.constant 0 : index
      %c0_49 = arith.constant 0 : index
      %91 = vector.load %arg7[%c0_47, %c0_48, %c0_49] : memref<1x1x1xf32, #tpu.memory_space<vmem>>, vector<1x1x1xf32>
      tpu.vector_store %arg7[%c0_47, %c0_48, %c0_49], %90 {strides = array<i32>} : memref<1x1x1xf32, #tpu.memory_space<vmem>>, vector<1x1x1xf32>,
    } else {
    }
    return
  }
  func.func @transform_0(%arg0: i32, %arg1: i32) -> (i32, i32) {
    %c1_i32 = arith.constant 1 : i32
    %0 = arith.muli %arg0, %c1_i32 : i32
    %1 = arith.addi %0, %arg1 : i32
    %c0_i32 = arith.constant 0 : i32
    %2 = arith.minsi %1, %c0_i32 : i32
    %c0_i32_0 = arith.constant 0 : i32
    %c0_i32_1 = arith.constant 0 : i32
    return %2, %c0_i32_0 : i32, i32
  }
  func.func @transform_1(%arg0: i32, %arg1: i32) -> (i32, i32) {
    %c1_i32 = arith.constant 1 : i32
    %0 = arith.muli %arg0, %c1_i32 : i32
    %1 = arith.addi %0, %arg1 : i32
    %c0_i32 = arith.constant 0 : i32
    %2 = arith.minsi %1, %c0_i32 : i32
    %c0_i32_0 = arith.constant 0 : i32
    %c0_i32_1 = arith.constant 0 : i32
    return %2, %c0_i32_0 : i32, i32
  }
  func.func @transform_2(%arg0: i32, %arg1: i32) -> (i32, i32) {
    %c1_i32 = arith.constant 1 : i32
    %0 = arith.muli %arg0, %c1_i32 : i32
    %1 = arith.addi %0, %arg1 : i32
    %c0_i32 = arith.constant 0 : i32
    %2 = arith.minsi %1, %c0_i32 : i32
    %c0_i32_0 = arith.constant 0 : i32
    %c0_i32_1 = arith.constant 0 : i32
    return %2, %c0_i32_0 : i32, i32
  }
  func.func @transform_3(%arg0: i32, %arg1: i32) -> (i32, i32, i32) {
    %c0_i32 = arith.constant 0 : i32
    %c0_i32_0 = arith.constant 0 : i32
    %c0_i32_1 = arith.constant 0 : i32
    return %arg0, %c0_i32, %c0_i32_0 : i32, i32, i32
  }
  func.func @transform_4(%arg0: i32, %arg1: i32) -> (i32, i32, i32) {
    %c0_i32 = arith.constant 0 : i32
    %c0_i32_0 = arith.constant 0 : i32
    %c0_i32_1 = arith.constant 0 : i32
    return %arg0, %c0_i32, %c0_i32_0 : i32, i32, i32
  }
  func.func @transform_5(%arg0: i32, %arg1: i32) -> (i32, i32, i32) {
    %c0_i32 = arith.constant 0 : i32
    %c0_i32_0 = arith.constant 0 : i32
    %c0_i32_1 = arith.constant 0 : i32
    return %arg0, %c0_i32, %c0_i32_0 : i32, i32, i32
  }
}

</mosaic_0001>

<llo_original>
// kernel: tpu_custom_call.1
$region0: #{tpu_custom_call.1}
  #allocation0 [shape = 'u32[]', space=smem, size = 0x4, offset = 0x4, fixed_abs, tag = 'smem constant byte address 0x4 - core index']
  #allocation1 [shape = 'u32[144,128]{1,0:T(1,128)}', space=vmem, size = 0x12000, scoped, tag = 'internal scratch']
  #allocation2 [shape = 'f32[16,1]{1,0:T(8,128)}', space=vmem, size = 0x2000, scoped, tag = 'scratch operand']
  #allocation3 [shape = 's32[16,1]{1,0:T(8,128)}', space=vmem, size = 0x2000, scoped, tag = 'scratch operand']
  #allocation4 [shape = 'f32[16,1]{1,0:T(8,128)}', space=vmem, size = 0x2000, scoped, tag = 'scratch operand']
  %s0 = inlined_call_operand.vmem [shape: f32[16,32], index: 0, kind: input, shape index: {}]
  %s1 = inlined_call_operand.vmem [shape: s32[16,1], index: 1, kind: input, shape index: {}]
  %s2 = inlined_call_operand.vmem [shape: f32[16,8], index: 2, kind: input, shape index: {}]
  %s3 = inlined_call_operand.hbm [shape: f32[1,1,1], index: 3, kind: output, shape index: {0}]
  %s4 = inlined_call_operand.hbm [shape: s32[1,1,1], index: 4, kind: output, shape index: {1}]
  %s5 = inlined_call_operand.hbm [shape: f32[1,1,1], index: 5, kind: output, shape index: {2}]
  %6 = xla_tuple %s3, %s4, %s5
  %s7 = sld [smem:[#allocation0]]
  $region46: #{tpu_custom_call.1} parent=0
    _
  %s9 = ssub.s32 1, %s7
  %s10 = scalar_select 0, %s9, %s7
  $region1: #{tpu_custom_call.1} parent=0
    #allocation5 [shape = 'u8[512]{0}', space=vmem, size = 0x400, scoped, tag = 'output window, operand 0, single buffered']
    #allocation6 [shape = 's32[1]{0}', space=sflag, size = 0x4, scoped, tag = 'scoped memory for tpu_custom_call.1']
    #allocation7 [shape = 'u8[512]{0}', space=vmem, size = 0x400, scoped, tag = 'output window, operand 1, single buffered']
    #allocation8 [shape = 's32[1]{0}', space=sflag, size = 0x4, scoped, tag = 'scoped memory for tpu_custom_call.1']
    #allocation9 [shape = 'u8[512]{0}', space=vmem, size = 0x400, scoped, tag = 'output window, operand 2, single buffered']
    %11 = vsyncpa [#allocation6], 0
    %12 = vsyncpa [#allocation8], 0
    // Predicated region
    $region2: #{tpu_custom_call.1} parent=1 // pred_check
      _
    $region3: #{tpu_custom_call.1} parent=1 // pred_check_branch
      %14 = sbr.rel (0) target = $region5
    $region4: #{tpu_custom_call.1} parent=1 // pred_region
      %s15 = sadd.s32 0, 0
      %p16 = scmp.lt.s32.totalorder %s15, 0
      %s17 = scalar_select %p16, %s15, 0
      %s18 = smul.u32 2, %s17
      %p19 = scmp.lt.s32.totalorder %s18, 1
      %s20 = scalar_select %p19, %s18, 1
      %s21 = smul.addr %s20, 8
      %s22 = scalar_lea.vmem %s0, %s21
      %s23 = sadd.s32 0, 0
      %p24 = scmp.lt.s32.totalorder %s23, 0
      %s25 = scalar_select %p24, %s23, 0
      %s26 = smul.u32 2, %s25
    $region5: #{tpu_custom_call.1} parent=1 // pred_fallthru
      _
    // Predicated region
    $region6: #{tpu_custom_call.1} parent=1 // pred_check
      _
    $region7: #{tpu_custom_call.1} parent=1 // pred_check_branch
      %28 = sbr.rel (0) target = $region9
    $region8: #{tpu_custom_call.1} parent=1 // pred_region
      %s29 = sadd.s32 0, 0
      %p30 = scmp.lt.s32.totalorder %s29, 0
      %s31 = scalar_select %p30, %s29, 0
      %s32 = smul.u32 2, %s31
      %p33 = scmp.lt.s32.totalorder %s32, 1
      %s34 = scalar_select %p33, %s32, 1
      %s35 = smul.addr %s34, 8
      %s36 = scalar_lea.vmem %s1, %s35
      %s37 = sadd.s32 0, 0
      %p38 = scmp.lt.s32.totalorder %s37, 0
      %s39 = scalar_select %p38, %s37, 0
      %s40 = smul.u32 2, %s39
    $region9: #{tpu_custom_call.1} parent=1 // pred_fallthru
      _
    // Predicated region
    $region10: #{tpu_custom_call.1} parent=1 // pred_check
      _
    $region11: #{tpu_custom_call.1} parent=1 // pred_check_branch
      %42 = sbr.rel (0) target = $region13
    $region12: #{tpu_custom_call.1} parent=1 // pred_region
      %s43 = sadd.s32 0, 0
      %p44 = scmp.lt.s32.totalorder %s43, 0
      %s45 = scalar_select %p44, %s43, 0
      %s46 = smul.u32 2, %s45
      %p47 = scmp.lt.s32.totalorder %s46, 1
      %s48 = scalar_select %p47, %s46, 1
      %s49 = smul.addr %s48, 8
      %s50 = scalar_lea.vmem %s2, %s49
      %s51 = sadd.s32 0, 0
      %p52 = scmp.lt.s32.totalorder %s51, 0
      %s53 = scalar_select %p52, %s51, 0
      %s54 = smul.u32 2, %s53
    $region13: #{tpu_custom_call.1} parent=1 // pred_fallthru
      _
    %s55 = sadd.s32 0, 0
    %p56 = scmp.lt.s32.totalorder %s55, 0
    %s57 = scalar_select %p56, %s55, 0
    %s58 = smul.u32 2, %s57
    %p59 = scmp.lt.s32.totalorder %s58, 1
    %s60 = scalar_select %p59, %s58, 1
    %s61 = smul.addr %s60, 8
    %s62 = scalar_lea.vmem %s0, %s61
    %s63 = sadd.s32 0, 0
    %p64 = scmp.lt.s32.totalorder %s63, 0
    %s65 = scalar_select %p64, %s63, 0
    %s66 = smul.u32 2, %s65
    %p67 = scmp.lt.s32.totalorder %s66, 1
    %s68 = scalar_select %p67, %s66, 1
    %s69 = smul.addr %s68, 8
    %s70 = scalar_lea.vmem %s1, %s69
    %s71 = sadd.s32 0, 0
    %p72 = scmp.lt.s32.totalorder %s71, 0
    %s73 = scalar_select %p72, %s71, 0
    %s74 = smul.u32 2, %s73
    %p75 = scmp.lt.s32.totalorder %s74, 1
    %s76 = scalar_select %p75, %s74, 1
    %s77 = smul.addr %s76, 8
    %s78 = scalar_lea.vmem %s2, %s77
    %s79 = sadd.s32 0, 0
    %p80 = scmp.lt.s32.totalorder %s79, 0
    %s81 = scalar_select %p80, %s79, 0
    %s82 = smul.u32 2, %s81
    %p83 = scmp.lt.s32.totalorder %s82, 1
    %s84 = scalar_select %p83, %s82, 1
    %s85 = smul.addr %s84, 8
    %s86 = scalar_lea.vmem %s0, %s85
    %s87 = sadd.s32 0, 0
    %p88 = scmp.lt.s32.totalorder %s87, 0
    %s89 = scalar_select %p88, %s87, 0
    %s90 = smul.u32 2, %s89
    %s91 = sadd.s32 0, 0
    %p92 = scmp.lt.s32.totalorder %s91, 0
    %s93 = scalar_select %p92, %s91, 0
    %s94 = smul.u32 2, %s93
    %p95 = scmp.lt.s32.totalorder %s94, 1
    %s96 = scalar_select %p95, %s94, 1
    %s97 = smul.addr %s96, 8
    %s98 = scalar_lea.vmem %s1, %s97
    %s99 = sadd.s32 0, 0
    %p100 = scmp.lt.s32.totalorder %s99, 0
    %s101 = scalar_select %p100, %s99, 0
    %s102 = smul.u32 2, %s101
    %s103 = sadd.s32 0, 0
    %p104 = scmp.lt.s32.totalorder %s103, 0
    %s105 = scalar_select %p104, %s103, 0
    %s106 = smul.u32 2, %s105
    %p107 = scmp.lt.s32.totalorder %s106, 1
    %s108 = scalar_select %p107, %s106, 1
    %s109 = smul.addr %s108, 8
    %s110 = scalar_lea.vmem %s2, %s109
    %s111 = sadd.s32 0, 0
    %p112 = scmp.lt.s32.totalorder %s111, 0
    %s113 = scalar_select %p112, %s111, 0
    %s114 = smul.u32 2, %s113
    %p115 = scmp.eq.s32.totalorder 0, 0
    // Predicated region
    $region14: #{tpu_custom_call.1} parent=1 // pred_check
      %p116 = pneg %p115
    $region15: #{tpu_custom_call.1} parent=1 // pred_check_branch
      %118 = sbr.rel (%p116) target = $region17
    $region16: #{tpu_custom_call.1} parent=1 // pred_region
      %vm119 = vcmask 7168
      %120 = vst.msk [vmem:[#allocation2] sm:$0xff] %vm119, 0.0
      %121 = vst.msk [vmem:[#allocation2 + $0x8] sm:$0xff] %vm119, 0.0
      %122 = vst.msk [vmem:[#allocation3] sm:$0xff] %vm119, 0
      %123 = vst.msk [vmem:[#allocation3 + $0x8] sm:$0xff] %vm119, 0
      %124 = vst.msk [vmem:[#allocation4] sm:$0xff] %vm119, 0.0
      %125 = vst.msk [vmem:[#allocation4 + $0x8] sm:$0xff] %vm119, 0.0
    $region17: #{tpu_custom_call.1} parent=1 // pred_fallthru
      _
    %s126 = sadd.s32 0, 0
    %v127 = vld [vmem:[%s86] sm:$0xff]
    %v128 = vld [vmem:[%s86 + $0x8] sm:$0xff]
    %v129 = vld [vmem:[%s98] sm:$0xff]
    %v130 = vld [vmem:[%s98 + $0x8] sm:$0xff]
    %s131 = smul.u32 %s126, 16
    %v132 = vlaneseq
    %v133 = vshrl.u32 %v132, 7
    %v134 = vadd.s32 %v133, 8
    %v135 = vstv %s131
    %v136 = vadd.s32 %v135, %v133
    %v137 = vadd.s32 %v135, %v134
    %vm138 = vcmp.lt.s32.totalorder %v136, 16
    %vm139 = vcmp.lt.s32.totalorder %v137, 16
    %vm140 = vcmp.ne.s32.totalorder %v129, 4294967295
    %vm141 = vcmp.ne.s32.totalorder %v130, 4294967295
    %vm142 = vmand %vm138, %vm140
    %vm143 = vmand %vm139, %vm141
    %vm144 = vcmask 261120
    %v145 = vsel %vm144, %v127, -inf
    %146 = vmax.xlane.f32.xlu0 %v145
    %v147 = vpop.xlane.xlu0 %146
    %v148 = vsel %vm144, %v128, -inf
    %149 = vmax.xlane.f32.xlu0 %v148
    %v150 = vpop.xlane.xlu0 %149
    %v151 = vsub.f32 %v127, %v147
    %v152 = vsub.f32 %v128, %v150
    %v153 = vmul.f32 %v151, 1.442695
    %v154 = vpow.pop %v153
    %v155 = vmul.f32 %v152, 1.442695
    %v156 = vpow.pop %v155
    %v157 = vsel %vm144, %v154, 0.0
    %158 = vadd.xlane.f32.xlu0 %v157
    %v159 = vpop.xlane.xlu0 %158
    %v160 = vsel %vm144, %v156, 0.0
    %161 = vadd.xlane.f32.xlu0 %v160
    %v162 = vpop.xlane.xlu0 %161
    %v163 = vlog2.pop %v159
    %v164 = vmul.f32 %v163, 0.6931472
    %v165 = vlog2.pop %v162
    %v166 = vmul.f32 %v165, 0.6931472
    %v167 = vadd.f32 %v147, %v164
    %v168 = vadd.f32 %v150, %v166
    %v169 = vsel %vm142, %v129, 0
    %v170 = vsel %vm143, %v130, 0
    %v171 = vlaneseq
    %v172 = vand.u32 %v171, 127
    %173 = vset.pattern.permute.xlu0 0
    %174 = vperm.xlu0 %173, %v169
    %v175 = vpop.permute.xlu0 %174
    %176 = vset.pattern.permute.xlu0 0
    %177 = vperm.xlu0 %176, %v170
    %v178 = vpop.permute.xlu0 %177
    %vm179 = vcmp.eq.s32.totalorder %v172, %v175
    %vm180 = vcmp.eq.s32.totalorder %v172, %v178
    %v181 = vsel %vm179, 0.9, 0.0032258064
    %v182 = vsel %vm180, 0.9, 0.0032258064
    %v183 = vmul.f32 %v181, %v127
    %v184 = vmul.f32 %v182, %v128
    %v185 = vsel %vm144, %v183, 0.0
    %186 = vadd.xlane.f32.xlu0 %v185
    %v187 = vpop.xlane.xlu0 %186
    %v188 = vsel %vm144, %v184, 0.0
    %189 = vadd.xlane.f32.xlu0 %v188
    %v190 = vpop.xlane.xlu0 %189
    %v191 = vadd.f32 %v167, -0.6684817
    %v192 = vadd.f32 %v168, -0.6684817
    %v193 = vsub.f32 %v191, %v187
    %v194 = vsub.f32 %v192, %v190
    %v195 = vsel %vm142, %v193, 0.0
    %v196 = vsel %vm143, %v194, 0.0
    %v197 = vsel %vm142, 1, 0
    %v198 = vsel %vm143, 1, 0
    %v199 = vld [vmem:[#allocation2] sm:$0xff]
    %v200 = vld [vmem:[#allocation2 + $0x8] sm:$0xff]
    %v201 = vadd.f32 %v199, %v195
    %v202 = vadd.f32 %v200, %v196
    %vm203 = vcmask 7168
    %204 = vst.msk [vmem:[#allocation2] sm:$0xff] %vm203, %v201
    %205 = vst.msk [vmem:[#allocation2 + $0x8] sm:$0xff] %vm203, %v202
    %v206 = vld [vmem:[#allocation3] sm:$0xff]
    %v207 = vld [vmem:[#allocation3 + $0x8] sm:$0xff]
    %v208 = vadd.s32 %v206, %v197
    %v209 = vadd.s32 %v207, %v198
    %210 = vst.msk [vmem:[#allocation3] sm:$0xff] %vm203, %v208
    %211 = vst.msk [vmem:[#allocation3 + $0x8] sm:$0xff] %vm203, %v209
    %v212 = vld [vmem:[#allocation4] sm:$0xff]
    %v213 = vld [vmem:[#allocation4 + $0x8] sm:$0xff]
    %v214 = vld [vmem:[%s110] sm:$0xff]
    %v215 = vld [vmem:[%s110 + $0x8] sm:$0xff]
    %vm216 = vcmask 64512
    %v217 = vsel %vm216, %v214, -inf
    %218 = vmax.xlane.f32.xlu0 %v217
    %v219 = vpop.xlane.xlu0 %218
    %v220 = vsel %vm216, %v215, -inf
    %221 = vmax.xlane.f32.xlu0 %v220
    %v222 = vpop.xlane.xlu0 %221
    %v223 = vsub.f32 %v214, %v219
    %v224 = vsub.f32 %v215, %v222
    %v225 = vmul.f32 %v223, 1.442695
    %v226 = vpow.pop %v225
    %v227 = vmul.f32 %v224, 1.442695
    %v228 = vpow.pop %v227
    %v229 = vsel %vm216, %v226, 0.0
    %230 = vadd.xlane.f32.xlu0 %v229
    %v231 = vpop.xlane.xlu0 %230
    %v232 = vsel %vm216, %v228, 0.0
    %233 = vadd.xlane.f32.xlu0 %v232
    %v234 = vpop.xlane.xlu0 %233
    %v235 = vmul.f32 %v226, %v214
    %v236 = vmul.f32 %v228, %v215
    %v237 = vsel %vm216, %v235, 0.0
    %238 = vadd.xlane.f32.xlu0 %v237
    %v239 = vpop.xlane.xlu0 %238
    %v240 = vsel %vm216, %v236, 0.0
    %241 = vadd.xlane.f32.xlu0 %v240
    %v242 = vpop.xlane.xlu0 %241
    %v243 = vlog2.pop %v231
    %v244 = vmul.f32 %v243, 0.6931472
    %v245 = vlog2.pop %v234
    %v246 = vmul.f32 %v245, 0.6931472
    %v247 = vadd.f32 %v219, %v244
    %v248 = vadd.f32 %v222, %v246
    %v249 = vrcp.pop %v231
    %v250 = vmul.f32 %v239, %v249
    %v251 = vrcp.pop %v234
    %v252 = vmul.f32 %v242, %v251
    %v253 = vsub.f32 %v247, %v250
    %v254 = vsub.f32 %v248, %v252
    %v255 = vsel %vm138, %v253, 0.0
    %v256 = vsel %vm139, %v254, 0.0
    %v257 = vadd.f32 %v212, %v255
    %v258 = vadd.f32 %v213, %v256
    %259 = vst.msk [vmem:[#allocation4] sm:$0xff] %vm203, %v257
    %260 = vst.msk [vmem:[#allocation4 + $0x8] sm:$0xff] %vm203, %v258
    // Predicated region
    $region18: #{tpu_custom_call.1} parent=1 // pred_check
      %p261 = pneg %p115
    $region19: #{tpu_custom_call.1} parent=1 // pred_check_branch
      %263 = sbr.rel (%p261) target = $region21
    $region20: #{tpu_custom_call.1} parent=1 // pred_region
      %v264 = vld [vmem:[#allocation2] sm:$0xff]
      %v265 = vld [vmem:[#allocation2 + $0x8] sm:$0xff]
      %v266 = vsel %vm203, %v264, 0.0
      %v267 = vsel %vm203, %v265, 0.0
      %v268 = vadd.f32 %v266, %v267
      %269 = vadd.xlane.f32.xlu0 %v268
      %v270 = vpop.xlane.xlu0 %269
      %v271 = vrot.slane %v270, 4
      %v272 = vadd.f32 %v270, %v271
      %v273 = vrot.slane %v272, 2
      %v274 = vadd.f32 %v272, %v273
      %v275 = vrot.slane %v274, 1
      %v276 = vadd.f32 %v274, %v275
      %s277 = vtos %v276
      %v278 = vstv %s277
      %vm279 = vcmask 0
      %280 = vst.msk [vmem:[#allocation5] sm:$0x1] %vm279, %v278
      %v281 = vld [vmem:[#allocation3] sm:$0xff]
      %v282 = vld [vmem:[#allocation3 + $0x8] sm:$0xff]
      %v283 = vsel %vm203, %v281, 0
      %v284 = vsel %vm203, %v282, 0
      %v285 = vadd.s32 %v283, %v284
      %v286 = vand.u32 %v285, 65535
      %v287 = vshrl.u32 %v285, 16
      %v288 = vcvt.s32.f32 %v286
      %v289 = vcvt.s32.f32 %v287
      %290 = vadd.xlane.f32.xlu0 %v288
      %v291 = vpop.xlane.xlu0 %290
      %292 = vadd.xlane.f32.xlu0 %v289
      %v293 = vpop.xlane.xlu0 %292
      %v294 = vcvt.f32.s32 %v291
      %v295 = vcvt.f32.s32 %v293
      %v296 = vshll.u32 %v295, 16
      %v297 = vadd.s32 %v296, %v294
      %v298 = vrot.slane %v297, 4
      %v299 = vadd.s32 %v297, %v298
      %v300 = vrot.slane %v299, 2
      %v301 = vadd.s32 %v299, %v300
      %v302 = vrot.slane %v301, 1
      %v303 = vadd.s32 %v301, %v302
      %s304 = vtos %v303
      %v305 = vstv %s304
      %306 = vst.msk [vmem:[#allocation7] sm:$0x1] %vm279, %v305
      %v307 = vld [vmem:[#allocation4] sm:$0xff]
      %v308 = vld [vmem:[#allocation4 + $0x8] sm:$0xff]
      %v309 = vsel %vm203, %v307, 0.0
      %v310 = vsel %vm203, %v308, 0.0
      %v311 = vadd.f32 %v309, %v310
      %312 = vadd.xlane.f32.xlu0 %v311
      %v313 = vpop.xlane.xlu0 %312
      %v314 = vrot.slane %v313, 4
      %v315 = vadd.f32 %v313, %v314
      %v316 = vrot.slane %v315, 2
      %v317 = vadd.f32 %v315, %v316
      %v318 = vrot.slane %v317, 1
      %v319 = vadd.f32 %v317, %v318
      %s320 = vtos %v319
      %v321 = vstv %s320
      %322 = vst.msk [vmem:[#allocation9] sm:$0x1] %vm279, %v321
    $region21: #{tpu_custom_call.1} parent=1 // pred_fallthru
      _
    // Predicated region
    $region22: #{tpu_custom_call.1} parent=1 // pred_check
      _
    $region23: #{tpu_custom_call.1} parent=1 // pred_check_branch
      %324 = sbr.rel (0) target = $region25
    $region24: #{tpu_custom_call.1} parent=1 // pred_region
      %s326 = ssub.s32 16, 16
      %327 = vsyncadd [#allocation6], %s326
      %s329 = sshll.u32 [#allocation5], 4
      %s330 = int_to_ptr.vmem [resolvable:$true] %s329
      %332 = dma.vmem_to_hbm [thread:$0]  %s330, 16, %s3, [#allocation6]
    $region25: #{tpu_custom_call.1} parent=1 // pred_fallthru
      _
    // Predicated region
    $region26: #{tpu_custom_call.1} parent=1 // pred_check
      _
    $region27: #{tpu_custom_call.1} parent=1 // pred_check_branch
      %334 = sbr.rel (0) target = $region29
    $region28: #{tpu_custom_call.1} parent=1 // pred_region
      %s336 = ssub.s32 16, 16
      %337 = vsyncadd [#allocation8], %s336
      %s339 = sshll.u32 [#allocation7], 4
      %s340 = int_to_ptr.vmem [resolvable:$true] %s339
      %342 = dma.vmem_to_hbm [thread:$0]  %s340, 16, %s4, [#allocation8]
    $region29: #{tpu_custom_call.1} parent=1 // pred_fallthru
      _
    // Predicated region
    $region30: #{tpu_custom_call.1} parent=1 // pred_check
      _
    $region31: #{tpu_custom_call.1} parent=1 // pred_check_branch
      %344 = sbr.rel (0) target = $region33
    $region32: #{tpu_custom_call.1} parent=1 // pred_region
      %s346 = ssub.s32 16, 16
      %347 = vsyncadd [#allocation8], %s346
      %s349 = sshll.u32 [#allocation9], 4
      %s350 = int_to_ptr.vmem [resolvable:$true] %s349
      %352 = dma.vmem_to_hbm [thread:$0]  %s350, 16, %s5, [#allocation8]
    $region33: #{tpu_custom_call.1} parent=1 // pred_fallthru
      _
    // Predicated region
    $region34: #{tpu_custom_call.1} parent=1 // pred_check
      _
    $region35: #{tpu_custom_call.1} parent=1 // pred_check_branch
      %354 = sbr.rel (0) target = $region37
    $region36: #{tpu_custom_call.1} parent=1 // pred_region
      %355 = dma.done [#allocation6], 16
    $region37: #{tpu_custom_call.1} parent=1 // pred_fallthru
      _
    // Predicated region
    $region38: #{tpu_custom_call.1} parent=1 // pred_check
      _
    $region39: #{tpu_custom_call.1} parent=1 // pred_check_branch
      %357 = sbr.rel (0) target = $region41
    $region40: #{tpu_custom_call.1} parent=1 // pred_region
      %358 = dma.done [#allocation8], 16
    $region41: #{tpu_custom_call.1} parent=1 // pred_fallthru
      _
    // Predicated region
    $region42: #{tpu_custom_call.1} parent=1 // pred_check
      _
    $region43: #{tpu_custom_call.1} parent=1 // pred_check_branch
      %360 = sbr.rel (0) target = $region45
    $region44: #{tpu_custom_call.1} parent=1 // pred_region
      %361 = dma.done [#allocation8], 16
    $region45: #{tpu_custom_call.1} parent=1 // pred_fallthru
      _
    %362 = vsyncpa [#allocation6], 1
    %363 = vsyncpa [#allocation8], 1

</llo_original>
